<compile_context>
chip_gen: v7x
topology: tpu7x:2x2x1
jax: 0.10.0
libtpu: 0.0.40
codegen_flags: <defaults>
</compile_context>

<pallas_src>
import jax
import jax.numpy as jnp
from jax.experimental import pallas as pl
from jax.experimental.pallas import tpu as pltpu

LATENT_DIM = 20
HIDDEN = 100
HIDDEN_PAD = 128          # lane-dense padding of the hidden dim (zero-padded)
N_ACTIONS = 4
DEFAULT_TB = 4096         # batch tile (safe on v7x 64 MiB VMEM; >=2 tiles once B>TB)


def _round_up(x, m):
    return (x + m - 1) // m * m


def dqn_kernel(z_ref, w1_ref, b1_ref, w2_ref, b2_ref, out_ref):
    # z_ref: (TB, 20) f32, w1_ref: (20, 128) bf16, b1_ref: (1, 128) f32
    # w2_ref: (128, 4) bf16, b2_ref: (1, 4) f32, out_ref: (TB, 4) f32
    z = z_ref[...].astype(jnp.bfloat16)                                 # in-kernel cast
    h = jnp.dot(z, w1_ref[...], preferred_element_type=jnp.float32)    # (TB, 128) f32
    h = jnp.maximum(h + b1_ref[...], 0.0)                              # bias + ReLU in f32
    q = jnp.dot(h.astype(jnp.bfloat16), w2_ref[...],
                preferred_element_type=jnp.float32)                    # (TB, 4) f32
    out_ref[...] = (q + b2_ref[...]).astype(out_ref.dtype)


def dqn_forward_pallas(z, w1p, b1p, w2p, b2, *, tb=DEFAULT_TB):
    """z: (B, LATENT_DIM) f32/bf16. Padded/bf16 params from prepare_params()."""
    B = z.shape[0]

    # Tile choice: whole (8-rounded) batch if it fits in one tile, else `tb`.
    # For B > tb this yields >= 2 grid steps => both v7x TensorCores get work.
    b8 = _round_up(B, 8)
    TB = b8 if b8 <= tb else tb
    grid = (pl.cdiv(B, TB),)   # ragged last block handled by Pallas (masked writeback)

    flops = 2 * B * (LATENT_DIM * HIDDEN_PAD + HIDDEN_PAD * N_ACTIONS)
    bytes_accessed = (
        z.size * z.dtype.itemsize
        + w1p.size * 2 + b1p.size * 4 + w2p.size * 2 + b2.size * 4
        + B * N_ACTIONS * 4
    )

    out = pl.pallas_call(
        dqn_kernel,
        out_shape=jax.ShapeDtypeStruct((B, N_ACTIONS), jnp.float32),
        grid_spec=pltpu.PrefetchScalarGridSpec(
            num_scalar_prefetch=0,
            grid=grid,
            in_specs=[
                pl.BlockSpec((TB, LATENT_DIM), lambda i: (i, 0)),          # z tile
                pl.BlockSpec((LATENT_DIM, HIDDEN_PAD), lambda i: (0, 0)),  # w1 (resident)
                pl.BlockSpec((1, HIDDEN_PAD), lambda i: (0, 0)),           # b1 (resident)
                pl.BlockSpec((HIDDEN_PAD, N_ACTIONS), lambda i: (0, 0)),   # w2 (resident)
                pl.BlockSpec((1, N_ACTIONS), lambda i: (0, 0)),            # b2 (resident)
            ],
            out_specs=pl.BlockSpec((TB, N_ACTIONS), lambda i: (i, 0)),
        ),
        compiler_params=pltpu.CompilerParams(
            dimension_semantics=("parallel",),   # shard batch tiles across TCs (v7x)
        ),
        cost_estimate=pl.CostEstimate(
            flops=flops, transcendentals=0, bytes_accessed=bytes_accessed),
    )(z, w1p, b1p, w2p, b2)

    return out


def dqn_forward(z, w1p, b1p, w2p, b2, *, use_pallas=None):
    """Dispatch: tiny batches go to plain XLA (launch overhead dominates there).

    Threshold should be re-benchmarked per generation; with the wrapper-copy
    removal the Pallas path is a single one-pass kernel, so the crossover is low.
    """
    if use_pallas is None:
        use_pallas = z.shape[0] >= 512
    if use_pallas:
        return dqn_forward_pallas(z, w1p, b1p, w2p, b2)
    # XLA fallback uses the same bf16 padded weights => same precision as the
    # Pallas path (not bit-identical to the pure-f32 reference).
    h = jnp.maximum(z.astype(jnp.float32) @ w1p.astype(jnp.float32) + b1p, 0.0)
    return h @ w2p.astype(jnp.float32) + b2


# ----------------------------- init / reference -----------------------------

def xavier_uniform_relu(key, fan_in, fan_out):
    # Matches nn.init.xavier_uniform_(w, gain=calculate_gain('relu')):
    #   gain = sqrt(2), bound = gain * sqrt(6 / (fan_in + fan_out))
    gain = jnp.sqrt(2.0)
    bound = gain * jnp.sqrt(6.0 / (fan_in + fan_out))
    # PyTorch orientation (out, in), transposed to (in, out) for z @ W.
    w = jax.random.uniform(key, (fan_out, fan_in), jnp.float32, -bound, bound)
    return w.T


def init_params(key):
    k1, k2 = jax.random.split(key)
    w1 = xavier_uniform_relu(k1, LATENT_DIM, HIDDEN)        # (20, 100) f32
    b1 = jnp.full((1, HIDDEN), 0.01, dtype=jnp.float32)
    w2 = xavier_uniform_relu(k2, HIDDEN, N_ACTIONS)         # (100, 4) f32
    b2 = jnp.full((1, N_ACTIONS), 0.01, dtype=jnp.float32)
    return w1, b1, w2, b2


def prepare_params(w1, b1, w2, b2):
    """Zero-pad HIDDEN 100->128 (result-preserving) and cast weights to bf16."""
    w1p = jnp.pad(w1, ((0, 0), (0, HIDDEN_PAD - HIDDEN))).astype(jnp.bfloat16)
    b1p = jnp.pad(b1, ((0, 0), (0, HIDDEN_PAD - HIDDEN)))                 # f32
    w2p = jnp.pad(w2, ((0, HIDDEN_PAD - HIDDEN), (0, 0))).astype(jnp.bfloat16)
    return w1p, b1p, w2p, b2


def reference_forward(z, w1, b1, w2, b2):
    # Pure f32 reference matching the PyTorch module semantics.
    h = jnp.maximum(z @ w1 + b1, 0.0)
    return h @ w2 + b2


if __name__ == "__main__":
    key = jax.random.PRNGKey(0)
    k_param, k_z1, k_z2 = jax.random.split(key, 3)

    w1, b1, w2, b2 = init_params(k_param)
    w1p, b1p, w2p, b2p = prepare_params(w1, b1, w2, b2)

    # Small demo batch: single-tile path (grid = 1).
    B = 8
    z = jax.random.normal(k_z1, (B, LATENT_DIM), dtype=jnp.float32)
    q = dqn_forward_pallas(z, w1p, b1p, w2p, b2p)
    q = jax.block_until_ready(q)
    q_ref = reference_forward(z, w1, b1, w2, b2)
    assert q.shape == (B, N_ACTIONS)
    # bf16 matmul inputs => loosened tolerance vs the f32 reference.
    assert jnp.allclose(q, q_ref, atol=5e-2, rtol=5e-2)

    # Multi-tile path with a ragged last block (no wrapper pad/slice):
    # B2=600 with tb=256 -> grid=3, last block covers only 88 rows (masked).
    B2 = 600
    z2 = jax.random.normal(k_z2, (B2, LATENT_DIM), dtype=jnp.float32)
    q2 = dqn_forward_pallas(z2, w1p, b1p, w2p, b2p, tb=256)
    q2 = jax.block_until_ready(q2)
    q2_ref = reference_forward(z2, w1, b1, w2, b2)
    assert q2.shape == (B2, N_ACTIONS)
    assert jnp.allclose(q2, q2_ref, atol=5e-2, rtol=5e-2)

    print("KERNEL_OK")
</pallas_src>

<mosaic_0001>
module attributes {stable_mosaic.version = 11 : i64} {
  func.func @dqn_kernel(%arg0: i32, %arg1: memref<8x20xf32, #tpu.memory_space<vmem>>, %arg2: memref<20x128xbf16, #tpu.memory_space<vmem>>, %arg3: memref<1x128xf32, #tpu.memory_space<vmem>>, %arg4: memref<128x4xbf16, #tpu.memory_space<vmem>>, %arg5: memref<1x4xf32, #tpu.memory_space<vmem>>, %arg6: memref<8x4xf32, #tpu.memory_space<vmem>>) attributes {dimension_semantics = [#tpu.dimension_semantics<parallel>], iteration_bounds = array<i64: 1>, scalar_prefetch = 0 : i64, scratch_operands = 0 : i64, tpu.core_type = #tpu.core_type<tc>, window_params = [{transform_indices = @transform_0, window_bounds = array<i64: 8, 20>}, {pipeline_mode = #tpu.pipeline_mode<synchronous>, transform_indices = @transform_1, window_bounds = array<i64: 20, 128>}, {pipeline_mode = #tpu.pipeline_mode<synchronous>, transform_indices = @transform_2, window_bounds = array<i64: 1, 128>}, {pipeline_mode = #tpu.pipeline_mode<synchronous>, transform_indices = @transform_3, window_bounds = array<i64: 128, 4>}, {pipeline_mode = #tpu.pipeline_mode<synchronous>, transform_indices = @transform_4, window_bounds = array<i64: 1, 4>}, {transform_indices = @transform_5, window_bounds = array<i64: 8, 4>}]} {
    %c0 = arith.constant 0 : index
    %c0_0 = arith.constant 0 : index
    %0 = vector.load %arg1[%c0, %c0_0] : memref<8x20xf32, #tpu.memory_space<vmem>>, vector<8x20xf32>
    %1 = arith.truncf %0 : vector<8x20xf32> to vector<8x20xbf16>
    %c0_1 = arith.constant 0 : index
    %c0_2 = arith.constant 0 : index
    %2 = vector.load %arg2[%c0_1, %c0_2] : memref<20x128xbf16, #tpu.memory_space<vmem>>, vector<20x128xbf16>
    %cst = arith.constant dense<0.000000e+00> : vector<8x128xf32>
    %3 = tpu.matmul %1, %2, %cst {dimension_numbers = #tpu.dot_dimension_numbers<[1], [0], [0], [1], [0, 0, 1, 1], [], []>} : vector<8x20xbf16>, vector<20x128xbf16>, vector<8x128xf32> -> vector<8x128xf32>
    %c0_3 = arith.constant 0 : index
    %c0_4 = arith.constant 0 : index
    %4 = vector.load %arg3[%c0_3, %c0_4] : memref<1x128xf32, #tpu.memory_space<vmem>>, vector<1x128xf32>
    %5 = vector.broadcast %4 : vector<1x128xf32> to vector<8x128xf32>
    %6 = arith.addf %3, %5 : vector<8x128xf32>
    %cst_5 = arith.constant 0.000000e+00 : f32
    %7 = vector.broadcast %cst_5 : f32 to vector<8x128xf32>
    %8 = arith.maximumf %6, %7 : vector<8x128xf32>
    %9 = arith.truncf %8 : vector<8x128xf32> to vector<8x128xbf16>
    %c0_6 = arith.constant 0 : index
    %c0_7 = arith.constant 0 : index
    %10 = vector.load %arg4[%c0_6, %c0_7] : memref<128x4xbf16, #tpu.memory_space<vmem>>, vector<128x4xbf16>
    %cst_8 = arith.constant dense<0.000000e+00> : vector<8x4xf32>
    %11 = tpu.matmul %9, %10, %cst_8 {dimension_numbers = #tpu.dot_dimension_numbers<[1], [0], [0], [1], [0, 0, 1, 1], [], []>} : vector<8x128xbf16>, vector<128x4xbf16>, vector<8x4xf32> -> vector<8x4xf32>
    %c0_9 = arith.constant 0 : index
    %c0_10 = arith.constant 0 : index
    %12 = vector.load %arg5[%c0_9, %c0_10] : memref<1x4xf32, #tpu.memory_space<vmem>>, vector<1x4xf32>
    %13 = vector.broadcast %12 : vector<1x4xf32> to vector<8x4xf32>
    %14 = arith.addf %11, %13 : vector<8x4xf32>
    %c0_11 = arith.constant 0 : index
    %c0_12 = arith.constant 0 : index
    %15 = vector.load %arg6[%c0_11, %c0_12] : memref<8x4xf32, #tpu.memory_space<vmem>>, vector<8x4xf32>
    tpu.vector_store %arg6[%c0_11, %c0_12], %14 {strides = array<i32>} : memref<8x4xf32, #tpu.memory_space<vmem>>, vector<8x4xf32>,
    return
  }
  func.func @transform_0(%arg0: i32) -> (i32, i32) {
    %c0_i32 = arith.constant 0 : i32
    %c0_i32_0 = arith.constant 0 : i32
    return %arg0, %c0_i32 : i32, i32
  }
  func.func @transform_1(%arg0: i32) -> (i32, i32) {
    %c0_i32 = arith.constant 0 : i32
    %c0_i32_0 = arith.constant 0 : i32
    %c0_i32_1 = arith.constant 0 : i32
    return %c0_i32, %c0_i32_0 : i32, i32
  }
  func.func @transform_2(%arg0: i32) -> (i32, i32) {
    %c0_i32 = arith.constant 0 : i32
    %c0_i32_0 = arith.constant 0 : i32
    %c0_i32_1 = arith.constant 0 : i32
    return %c0_i32, %c0_i32_0 : i32, i32
  }
  func.func @transform_3(%arg0: i32) -> (i32, i32) {
    %c0_i32 = arith.constant 0 : i32
    %c0_i32_0 = arith.constant 0 : i32
    %c0_i32_1 = arith.constant 0 : i32
    return %c0_i32, %c0_i32_0 : i32, i32
  }
  func.func @transform_4(%arg0: i32) -> (i32, i32) {
    %c0_i32 = arith.constant 0 : i32
    %c0_i32_0 = arith.constant 0 : i32
    %c0_i32_1 = arith.constant 0 : i32
    return %c0_i32, %c0_i32_0 : i32, i32
  }
  func.func @transform_5(%arg0: i32) -> (i32, i32) {
    %c0_i32 = arith.constant 0 : i32
    %c0_i32_0 = arith.constant 0 : i32
    return %arg0, %c0_i32 : i32, i32
  }
}

</mosaic_0001>

<llo_original>
// kernel: tpu_custom_call.1
$region0: #{tpu_custom_call.1}
  #allocation0 [shape = 'u32[]', space=smem, size = 0x4, offset = 0x4, fixed_abs, tag = 'smem constant byte address 0x4 - core index']
  #allocation1 [shape = 'u32[144,128]{1,0:T(1,128)}', space=vmem, size = 0x12000, scoped, tag = 'internal scratch']
  %s0 = inlined_call_operand.vmem [shape: f32[8,20], index: 0, kind: input, shape index: {}]
  %s1 = inlined_call_operand.vmem [shape: bf16[20,128], index: 1, kind: input, shape index: {}]
  %s2 = inlined_call_operand.vmem [shape: f32[1,128], index: 2, kind: input, shape index: {}]
  %s3 = inlined_call_operand.vmem [shape: bf16[128,4], index: 3, kind: input, shape index: {}]
  %s4 = inlined_call_operand.vmem [shape: f32[1,4], index: 4, kind: input, shape index: {}]
  %s5 = inlined_call_operand.vmem [shape: f32[8,4], index: 5, kind: output, shape index: {}]
  %s6 = sld [smem:[#allocation0]]
  $region30: #{tpu_custom_call.1} parent=0
    _
  %s8 = ssub.s32 1, %s6
  %s9 = scalar_select 0, %s8, %s6
  // Predicated region
  $region2: #{tpu_custom_call.1} parent=0 // pred_check
    _
  $region3: #{tpu_custom_call.1} parent=0 // pred_check_branch
    %11 = sbr.rel (0) target = $region5
  $region4: #{tpu_custom_call.1} parent=0 // pred_region
    _
  $region5: #{tpu_custom_call.1} parent=0 // pred_fallthru
    _
  // Predicated region
  $region6: #{tpu_custom_call.1} parent=0 // pred_check
    _
  $region7: #{tpu_custom_call.1} parent=0 // pred_check_branch
    %13 = sbr.rel (0) target = $region9
  $region8: #{tpu_custom_call.1} parent=0 // pred_region
    _
  $region9: #{tpu_custom_call.1} parent=0 // pred_fallthru
    _
  // Predicated region
  $region10: #{tpu_custom_call.1} parent=0 // pred_check
    _
  $region11: #{tpu_custom_call.1} parent=0 // pred_check_branch
    %15 = sbr.rel (0) target = $region13
  $region12: #{tpu_custom_call.1} parent=0 // pred_region
    _
  $region13: #{tpu_custom_call.1} parent=0 // pred_fallthru
    _
  // Predicated region
  $region14: #{tpu_custom_call.1} parent=0 // pred_check
    _
  $region15: #{tpu_custom_call.1} parent=0 // pred_check_branch
    %17 = sbr.rel (0) target = $region17
  $region16: #{tpu_custom_call.1} parent=0 // pred_region
    _
  $region17: #{tpu_custom_call.1} parent=0 // pred_fallthru
    _
  // Predicated region
  $region18: #{tpu_custom_call.1} parent=0 // pred_check
    _
  $region19: #{tpu_custom_call.1} parent=0 // pred_check_branch
    %19 = sbr.rel (0) target = $region21
  $region20: #{tpu_custom_call.1} parent=0 // pred_region
    _
  $region21: #{tpu_custom_call.1} parent=0 // pred_fallthru
    _
  %v21 = vld [vmem:[%s0] sm:$0xff]
  %v22 = vpack.c.bf16 %v21, %v21
  %v23 = vld [vmem:[%s1] sm:$0xf]
  %v24 = vld [vmem:[%s1 + $0x4] sm:$0xf]
  %v25 = vld [vmem:[%s1 + $0x8] sm:$0x3]
  %v26 = vld [vmem:[%s2] sm:$0x1]
  %v28 = vlaneseq
  %v29 = vshrl.u32 %v28, 7
  %v30 = vsub.s32 0, %v29
  %v31 = vrot.slane %v26, %v30
  %v36 = vunpack.c.l.b16 %v23
  %v37 = vunpack.c.l.b16 %v24
  %v38 = vunpack.c.l.b16 %v25
  %v39 = vpack.c.b16 %v37, %v36
  %v40 = vpack.c.b16 %v38, %v38
  %vm42 = vcmask 162816
  %v44 = vsel %vm42, %v22, 0
  %vm46 = vcmask 1041408
  %v48 = vsel %vm46, %v40, 0
  %50 = vmatprep.subr.bf16.mxu0 0
  %51 = vmatpush1.bf16.msra.mxu0 %v39
  %52 = vmatprep.subr.bf16.mxu0 0
  %53 = vmatpush1.bf16.msra.mxu0 %v48
  %54 = vmatprep.subr.bf16.mxu0 0
  %55 = vmatpush1.bf16.msra.mxu0 0
  %56 = vmatprep.subr.bf16.mxu0 0
  %57 = vmatpush1.bf16.msra.mxu0 0
  %58 = vmatprep.subr.bf16.mxu0 0
  %59 = vmatpush1.bf16.msra.mxu0 0
  %60 = vmatprep.subr.bf16.mxu0 0
  %61 = vmatpush1.bf16.msra.mxu0 0
  %62 = vmatprep.subr.bf16.mxu0 0
  %63 = vmatpush1.bf16.msra.mxu0 0
  %64 = vmatprep.subr.bf16.mxu0 0
  %65 = vmatpush1.bf16.msra.mxu0 0
  %66 = vmatprep.subr.bf16.mxu0 0
  %67 = vmatpush1.bf16.msra.mxu0 0
  %68 = vmatprep.subr.bf16.mxu0 0
  %69 = vmatpush1.bf16.msra.mxu0 0
  %70 = vmatprep.subr.bf16.mxu0 0
  %71 = vmatpush1.bf16.msra.mxu0 0
  %72 = vmatprep.subr.bf16.mxu0 0
  %73 = vmatpush1.bf16.msra.mxu0 0
  %74 = vmatprep.subr.bf16.mxu0 0
  %75 = vmatpush1.bf16.msra.mxu0 0
  %76 = vmatprep.subr.bf16.mxu0 0
  %77 = vmatpush1.bf16.msra.mxu0 0
  %78 = vmatprep.subr.bf16.mxu0 0
  %79 = vmatpush1.bf16.msra.mxu0 0
  %80 = vmatprep.subr.bf16.mxu0 0
  %81 = vmatpush1.bf16.msra.mxu0 0
  %82 = vmatprep.mubr.bf16.mxu0 0
  %83 = vmatmul.mubr.bf16.gmra.mrb[0].mxu0 %v44
  %v84 = vpop.f32.mrb[0].mxu0
  %v85 = vadd.f32 %v31, %v84
  %v86 = vpop.f32.mrb[0].mxu0
  %v87 = vpop.f32.mrb[0].mxu0
  %v88 = vpop.f32.mrb[0].mxu0
  %89 = vdwg.mxu0
  %v90 = vmax.f32 %v85, 0.0
  %v91 = vpack.c.bf16 %v90, %v90
  %v92 = vld [vmem:[%s3] sm:$0xf]
  %v93 = vld [vmem:[%s3 + $0x4] sm:$0xf]
  %v94 = vld [vmem:[%s3 + $0x8] sm:$0xf]
  %v95 = vld [vmem:[%s3 + $0xc] sm:$0xf]
  %v96 = vld [vmem:[%s3 + $0x10] sm:$0xf]
  %v97 = vld [vmem:[%s3 + $0x14] sm:$0xf]
  %v98 = vld [vmem:[%s3 + $0x18] sm:$0xf]
  %v99 = vld [vmem:[%s3 + $0x1c] sm:$0xf]
  %v100 = vld [vmem:[%s3 + $0x20] sm:$0xf]
  %v101 = vld [vmem:[%s3 + $0x24] sm:$0xf]
  %v102 = vld [vmem:[%s3 + $0x28] sm:$0xf]
  %v103 = vld [vmem:[%s3 + $0x2c] sm:$0xf]
  %v104 = vld [vmem:[%s3 + $0x30] sm:$0xf]
  %v105 = vld [vmem:[%s3 + $0x34] sm:$0xf]
  %v106 = vld [vmem:[%s3 + $0x38] sm:$0xf]
  %v107 = vld [vmem:[%s3 + $0x3c] sm:$0xf]
  %v108 = vld [vmem:[%s4] sm:$0x1]
  %v110 = vlaneseq
  %v111 = vshrl.u32 %v110, 7
  %v112 = vsub.s32 0, %v111
  %v113 = vrot.slane %v108, %v112
  %v131 = vunpack.c.l.b16 %v92
  %v132 = vunpack.c.l.b16 %v93
  %v133 = vunpack.c.l.b16 %v94
  %v134 = vunpack.c.l.b16 %v95
  %v135 = vunpack.c.l.b16 %v96
  %v136 = vunpack.c.l.b16 %v97
  %v137 = vunpack.c.l.b16 %v98
  %v138 = vunpack.c.l.b16 %v99
  %v139 = vunpack.c.l.b16 %v100
  %v140 = vunpack.c.l.b16 %v101
  %v141 = vunpack.c.l.b16 %v102
  %v142 = vunpack.c.l.b16 %v103
  %v143 = vunpack.c.l.b16 %v104
  %v144 = vunpack.c.l.b16 %v105
  %v145 = vunpack.c.l.b16 %v106
  %v146 = vunpack.c.l.b16 %v107
  %v147 = vpack.c.b16 %v132, %v131
  %v148 = vpack.c.b16 %v134, %v133
  %v149 = vpack.c.b16 %v136, %v135
  %v150 = vpack.c.b16 %v138, %v137
  %v151 = vpack.c.b16 %v140, %v139
  %v152 = vpack.c.b16 %v142, %v141
  %v153 = vpack.c.b16 %v144, %v143
  %v154 = vpack.c.b16 %v146, %v145
  %163 = vmatprep.subr.bf16.mxu0 0
  %164 = vmatpush1.bf16.msra.mxu0 %v147
  %165 = vmatprep.subr.bf16.mxu0 0
  %166 = vmatpush1.bf16.msra.mxu0 %v148
  %167 = vmatprep.subr.bf16.mxu0 0
  %168 = vmatpush1.bf16.msra.mxu0 %v149
  %169 = vmatprep.subr.bf16.mxu0 0
  %170 = vmatpush1.bf16.msra.mxu0 %v150
  %171 = vmatprep.subr.bf16.mxu0 0
  %172 = vmatpush1.bf16.msra.mxu0 %v151
  %173 = vmatprep.subr.bf16.mxu0 0
  %174 = vmatpush1.bf16.msra.mxu0 %v152
  %175 = vmatprep.subr.bf16.mxu0 0
  %176 = vmatpush1.bf16.msra.mxu0 %v153
  %177 = vmatprep.subr.bf16.mxu0 0
  %178 = vmatpush1.bf16.msra.mxu0 %v154
  %179 = vmatprep.subr.bf16.mxu0 0
  %180 = vmatpush1.bf16.msra.mxu0 0
  %181 = vmatprep.subr.bf16.mxu0 0
  %182 = vmatpush1.bf16.msra.mxu0 0
  %183 = vmatprep.subr.bf16.mxu0 0
  %184 = vmatpush1.bf16.msra.mxu0 0
  %185 = vmatprep.subr.bf16.mxu0 0
  %186 = vmatpush1.bf16.msra.mxu0 0
  %187 = vmatprep.subr.bf16.mxu0 0
  %188 = vmatpush1.bf16.msra.mxu0 0
  %189 = vmatprep.subr.bf16.mxu0 0
  %190 = vmatpush1.bf16.msra.mxu0 0
  %191 = vmatprep.subr.bf16.mxu0 0
  %192 = vmatpush1.bf16.msra.mxu0 0
  %193 = vmatprep.subr.bf16.mxu0 0
  %194 = vmatpush1.bf16.msra.mxu0 0
  %195 = vmatprep.mubr.bf16.mxu0 0
  %196 = vmatmul.mubr.bf16.gmra.mrb[0].mxu0 %v91
  %v197 = vpop.f32.mrb[0].mxu0
  %v198 = vadd.f32 %v113, %v197
  %v199 = vpop.f32.mrb[0].mxu0
  %v200 = vpop.f32.mrb[0].mxu0
  %v201 = vpop.f32.mrb[0].mxu0
  %202 = vdwg.mxu0
  %vm203 = vcmask 31744
  %204 = vst.msk [vmem:[%s5] sm:$0xff] %vm203, %v198
  // Predicated region
  $region22: #{tpu_custom_call.1} parent=0 // pred_check
    _
  $region23: #{tpu_custom_call.1} parent=0 // pred_check_branch
    %206 = sbr.rel (0) target = $region25
  $region24: #{tpu_custom_call.1} parent=0 // pred_region
    _
  $region25: #{tpu_custom_call.1} parent=0 // pred_fallthru
    _
  // Predicated region
  $region26: #{tpu_custom_call.1} parent=0 // pred_check
    _
  $region27: #{tpu_custom_call.1} parent=0 // pred_check_branch
    %208 = sbr.rel (0) target = $region29
  $region28: #{tpu_custom_call.1} parent=0 // pred_region
    _
  $region29: #{tpu_custom_call.1} parent=0 // pred_fallthru
    _

</llo_original>
